<compile_context>
chip_gen: v7x
topology: tpu7x:2x2x1
jax: 0.10.0
libtpu: 0.0.40
codegen_flags: <defaults>
</compile_context>

<pallas_src>
import jax
import jax.numpy as jnp
from jax.experimental import pallas as pl
from jax.experimental.pallas import tpu as pltpu

EPS = 1e-5          # BatchNorm2d default eps
MAX_TILE = 1024     # pooled rows per grid step; x block = (4,1024,36)->lane-padded ~4 MiB/buf


def _round_up(a, b):
    return (a + b - 1) // b * b


# --------------------------------------------------------------------------------------
# Pass 1: per-tile partial BatchNorm statistics of the (bias-less) conv output h.
# --------------------------------------------------------------------------------------
def _stats_kernel(x_ref, w_ref, p_ref):
    # x_ref: (4, TILE, F) pool-quadrant-major im2col rows (compute dtype)
    # w_ref: (F, C)       3x3 conv weight (compute dtype)
    # p_ref: (1, 2, C)    f32 partials [sum(h), sum(h*h)] over this tile
    c = p_ref.shape[-1]
    s_acc = jnp.zeros((1, c), jnp.float32)
    q_acc = jnp.zeros((1, c), jnp.float32)
    for q in range(4):                                   # static unroll over quadrants
        h = jnp.dot(x_ref[q], w_ref[...], preferred_element_type=jnp.float32)
        s_acc = s_acc + jnp.sum(h, axis=0, keepdims=True)
        q_acc = q_acc + jnp.sum(h * h, axis=0, keepdims=True)
    p_ref[...] = jnp.concatenate([s_acc, q_acc], axis=0)[None]


# --------------------------------------------------------------------------------------
# Pass 2: fused (BN-scaled conv + residual) matmul -> 2x2 max-pool -> +shift -> ReLU.
# --------------------------------------------------------------------------------------
def _apply_kernel(x_ref, w_ref, t_ref, o_ref):
    # x_ref: (4, TILE, F); w_ref: (F, C) = s*w_conv (+ w_res scattered into center tap)
    # t_ref: (1, C) = beta - mu*s + b_res; o_ref: (TILE, C)
    p0 = jnp.dot(x_ref[0], w_ref[...], preferred_element_type=jnp.float32)
    p1 = jnp.dot(x_ref[1], w_ref[...], preferred_element_type=jnp.float32)
    p2 = jnp.dot(x_ref[2], w_ref[...], preferred_element_type=jnp.float32)
    p3 = jnp.dot(x_ref[3], w_ref[...], preferred_element_type=jnp.float32)
    pooled = jnp.maximum(jnp.maximum(p0, p1), jnp.maximum(p2, p3))
    # the per-channel shift commutes with the max -> add once, after pooling
    o_ref[...] = jnp.maximum(pooled + t_ref[...], 0.0).astype(o_ref.dtype)


def cnn_res_block_forward(x, params, padding=1, compute_dtype=jnp.float32):
    """x: (B, Cin, H, W) float32 NCHW.  Returns (B, Cout, H//2, W//2) float32 NCHW."""
    B, Cin, H, W = x.shape
    Cout, _, K, _ = params["w_conv"].shape
    assert 2 * padding == K - 1, "residual add requires 'same' conv output size"
    assert H % 2 == 0 and W % 2 == 0, "MaxPool2d(2) path needs even spatial dims"

    Hh, Wh = H // 2, W // 2
    Nq = B * Hh * Wh                   # pooled pixels
    F = K * K * Cin                    # im2col feature width

    tile = min(MAX_TILE, _round_up(Nq, 8))
    num_tiles = pl.cdiv(Nq, tile)
    nq_pad = num_tiles * tile

    # ---------------- wrapper-side layout plumbing (single HBM materialization) --------
    # TODO(synk): keep the surrounding model NHWC to drop this transpose and the final one.
    xh = jnp.transpose(x, (0, 2, 3, 1))                                 # (B, H, W, Cin)
    xp = jnp.pad(xh, ((0, 0), (padding, padding), (padding, padding), (0, 0)))
    xp = xp.astype(compute_dtype)
    # im2col built directly in pool-quadrant-major, (b,i,j)-row-major order; feature
    # index = (dy*K + dx)*Cin + c.  One fused gather/concat -> one HBM write.
    quads = []
    for ph in range(2):
        for pw in range(2):
            taps = [xp[:, ph + dy:ph + dy + H:2, pw + dx:pw + dx + W:2, :]
                    for dy in range(K) for dx in range(K)]
            quads.append(jnp.concatenate(taps, axis=-1).reshape(Nq, F))
    x_col = jnp.stack(quads, axis=0)                                    # (4, Nq, F)
    if nq_pad != Nq:
        # zero rows contribute exactly 0 to the BN sums (conv bias is folded away),
        # so row padding is harmless for the statistics and is sliced off the output.
        x_col = jnp.pad(x_col, ((0, 0), (0, nq_pad - Nq), (0, 0)))

    # ---------------- weights -----------------------------------------------------------
    # NOTE: params["b_conv"] is intentionally unused: a per-channel constant added before
    # batch-statistics BatchNorm is mathematically a no-op (training-mode BN only).
    w_col = jnp.transpose(params["w_conv"], (2, 3, 1, 0)).reshape(F, Cout)   # f32
    center = (padding * K + padding) * Cin     # residual == center-tap columns of im2col
    if "w_res" in params:                      # module creates the 1x1 conv iff Cin != Cout
        w_res_mat = params["w_res"].reshape(Cout, Cin).T                     # (Cin, Cout)
        b_res = params["b_res"]
    else:                                      # identity residual (Cin == Cout)
        w_res_mat = jnp.eye(Cin, Cout, dtype=jnp.float32)
        b_res = jnp.zeros((Cout,), jnp.float32)
    w_res_full = jnp.zeros((F, Cout), jnp.float32).at[center:center + Cin, :].set(w_res_mat)

    compiler_params = pltpu.CompilerParams(
        dimension_semantics=("parallel",),              # megacore-friendly (v7x 2 TCs)
        vmem_limit_bytes=32 * 1024 * 1024)              # tiles budgeted well below this

    bpe = jnp.dtype(compute_dtype).itemsize

    # ---------------- pass 1: per-tile partial BN statistics ---------------------------
    stats_cost = pl.CostEstimate(
        flops=2 * 4 * nq_pad * F * Cout + 4 * 4 * nq_pad * Cout,
        transcendentals=0,
        bytes_accessed=bpe * (x_col.size + F * Cout) + 4 * num_tiles * 2 * Cout)
    partials = pl.pallas_call(
        _stats_kernel,
        out_shape=jax.ShapeDtypeStruct((num_tiles, 2, Cout), jnp.float32),
        grid=(num_tiles,),
        in_specs=[pl.BlockSpec((4, tile, F), lambda i: (0, i, 0)),
                  pl.BlockSpec((F, Cout), lambda i: (0, 0))],
        out_specs=pl.BlockSpec((1, 2, Cout), lambda i: (i, 0, 0)),
        compiler_params=compiler_params,
        cost_estimate=stats_cost,
    )(x_col, w_col.astype(compute_dtype))

    # ---------------- fold BN scale/shift + residual into one weight / shift (tiny) ----
    sums = jnp.sum(partials, axis=0)                    # (2, Cout) f32
    n_real = jnp.float32(4 * Nq)
    mu = sums[0] / n_real
    var = jnp.maximum(sums[1] / n_real - mu * mu, 0.0)  # biased variance (training BN)
    # TODO(synk): E[h^2]-E[h]^2 is cancellation-prone for very large / strongly biased
    # activations; switch to a shifted/Welford accumulation if tighter accuracy is needed.
    s = params["gamma"] * jax.lax.rsqrt(var + EPS)
    t_shift = (params["beta"] - mu * s + b_res)[None, :].astype(jnp.float32)   # (1, Cout)
    w_fused = (w_col * s[None, :] + w_res_full).astype(compute_dtype)          # (F, Cout)

    # ---------------- pass 2: fused conv+BN+residual -> max-pool -> ReLU ----------------
    apply_cost = pl.CostEstimate(
        flops=2 * 4 * nq_pad * F * Cout + 6 * nq_pad * Cout,
        transcendentals=0,
        bytes_accessed=bpe * (x_col.size + F * Cout) + 4 * (Cout + nq_pad * Cout))
    out_flat = pl.pallas_call(
        _apply_kernel,
        out_shape=jax.ShapeDtypeStruct((nq_pad, Cout), jnp.float32),
        grid=(num_tiles,),
        in_specs=[pl.BlockSpec((4, tile, F), lambda i: (0, i, 0)),
                  pl.BlockSpec((F, Cout), lambda i: (0, 0)),
                  pl.BlockSpec((1, Cout), lambda i: (0, 0))],
        out_specs=pl.BlockSpec((tile, Cout), lambda i: (i, 0)),
        compiler_params=compiler_params,
        cost_estimate=apply_cost,
    )(x_col, w_fused, t_shift)

    out_flat = out_flat[:Nq]
    # Dropout2d(p=0.0) is the identity.
    # TODO(synk): return channels-last (B, Hh, Wh, Cout) directly if the consumer allows,
    # dropping this transpose (and the NCHW->NHWC one above): pure layout tax.
    return jnp.transpose(out_flat.reshape(B, Hh, Wh, Cout), (0, 3, 1, 2))


def init_params(key, in_channels, out_channels=128, kernel_size=3):
    ks = jax.random.split(key, 6)
    p = {
        "w_conv": 0.1 * jax.random.normal(
            ks[0], (out_channels, in_channels, kernel_size, kernel_size), jnp.float32),
        "b_conv": 0.1 * jax.random.normal(ks[1], (out_channels,), jnp.float32),
        "gamma": 1.0 + 0.1 * jax.random.normal(ks[4], (out_channels,), jnp.float32),
        "beta": 0.1 * jax.random.normal(ks[5], (out_channels,), jnp.float32),
    }
    if in_channels != out_channels:   # module creates the 1x1 conv in this case
        p["w_res"] = 0.1 * jax.random.normal(
            ks[2], (out_channels, in_channels, 1, 1), jnp.float32)
        p["b_res"] = 0.1 * jax.random.normal(ks[3], (out_channels,), jnp.float32)
    return p


def cnn_res_block_ref(x, p, padding=1):
    """Pure-JAX reference of the PyTorch forward (training-mode BN, dropout p=0)."""
    dn = ("NCHW", "OIHW", "NCHW")
    hi = jax.lax.Precision.HIGHEST
    conv = jax.lax.conv_general_dilated(
        x, p["w_conv"], window_strides=(1, 1),
        padding=((padding, padding), (padding, padding)),
        dimension_numbers=dn, precision=hi) + p["b_conv"][None, :, None, None]
    if "w_res" in p:
        res = jax.lax.conv_general_dilated(
            x, p["w_res"], window_strides=(1, 1), padding=((0, 0), (0, 0)),
            dimension_numbers=dn, precision=hi) + p["b_res"][None, :, None, None]
    else:
        res = x
    mu = conv.mean(axis=(0, 2, 3), keepdims=True)
    var = jnp.var(conv, axis=(0, 2, 3), keepdims=True)          # biased variance
    bn = (p["gamma"][None, :, None, None] * (conv - mu) / jnp.sqrt(var + EPS)
          + p["beta"][None, :, None, None])
    y = bn + res
    Bc, C, Hc, Wc = y.shape
    y = y.reshape(Bc, C, Hc // 2, 2, Wc // 2, 2).max(axis=(3, 5))   # MaxPool2d(2)
    return jnp.maximum(y, 0.0)                                      # ReLU; dropout p=0


if __name__ == "__main__":
    key = jax.random.PRNGKey(0)
    kx, kp = jax.random.split(key)

    B, CIN, H, W = 2, 4, 16, 16
    COUT, KSIZE, PAD = 128, 3, 1   # module defaults: out_channels=128, kernel=3

    x = jax.random.normal(kx, (B, CIN, H, W), jnp.float32)
    params = init_params(kp, CIN, COUT, KSIZE)
    ref = cnn_res_block_ref(x, params, padding=PAD)

    # f32 compute path: strict check against the reference
    out = cnn_res_block_forward(x, params, padding=PAD)
    out = jax.block_until_ready(out)
    assert out.shape == (B, COUT, H // 2, W // 2)
    assert jnp.allclose(out, ref, atol=1e-4, rtol=1e-4), "f32 mismatch vs reference"

    # bf16 compute path (halves x_col HBM/VMEM bytes, native MXU rate): looser tolerance
    out_bf16 = cnn_res_block_forward(x, params, padding=PAD, compute_dtype=jnp.bfloat16)
    out_bf16 = jax.block_until_ready(out_bf16)
    assert jnp.allclose(out_bf16, ref, atol=5e-2, rtol=5e-2), "bf16 mismatch vs reference"

    print("KERNEL_OK")
</pallas_src>

<mosaic_0001>
module attributes {stable_mosaic.version = 11 : i64} {
  func.func @_stats_kernel(%arg0: i32, %arg1: memref<4x128x36xf32, #tpu.memory_space<vmem>>, %arg2: memref<36x128xf32, #tpu.memory_space<vmem>>, %arg3: memref<1x2x128xf32, #tpu.memory_space<vmem>>) attributes {dimension_semantics = [#tpu.dimension_semantics<parallel>], iteration_bounds = array<i64: 1>, scalar_prefetch = 0 : i64, scratch_operands = 0 : i64, tpu.core_type = #tpu.core_type<tc>, window_params = [{transform_indices = @transform_0, window_bounds = array<i64: 4, 128, 36>}, {pipeline_mode = #tpu.pipeline_mode<synchronous>, transform_indices = @transform_1, window_bounds = array<i64: 36, 128>}, {transform_indices = @transform_2, window_bounds = array<i64: 1, 2, 128>}]} {
    %cst = arith.constant 0.000000e+00 : f32
    %0 = vector.broadcast %cst : f32 to vector<1x128xf32>
    %cst_0 = arith.constant 0.000000e+00 : f32
    %1 = vector.broadcast %cst_0 : f32 to vector<1x128xf32>
    %c0 = arith.constant 0 : index
    %c0_1 = arith.constant 0 : index
    %c0_2 = arith.constant 0 : index
    %2 = vector.load %arg1[%c0, %c0_1, %c0_2] : memref<4x128x36xf32, #tpu.memory_space<vmem>>, vector<1x128x36xf32>
    %3 = vector.shape_cast %2 : vector<1x128x36xf32> to vector<128x36xf32>
    %c0_3 = arith.constant 0 : index
    %c0_4 = arith.constant 0 : index
    %4 = vector.load %arg2[%c0_3, %c0_4] : memref<36x128xf32, #tpu.memory_space<vmem>>, vector<36x128xf32>
    %cst_5 = arith.constant dense<0.000000e+00> : vector<128x128xf32>
    %5 = tpu.matmul %3, %4, %cst_5 {dimension_numbers = #tpu.dot_dimension_numbers<[1], [0], [0], [1], [0, 0, 1, 1], [], []>} : vector<128x36xf32>, vector<36x128xf32>, vector<128x128xf32> -> vector<128x128xf32>
    %cst_6 = arith.constant dense<0.000000e+00> : vector<128xf32>
    %6 = vector.multi_reduction <add>, %5, %cst_6 [0] : vector<128x128xf32> to vector<128xf32>
    %7 = vector.shape_cast %6 : vector<128xf32> to vector<1x128xf32>
    %8 = arith.addf %0, %7 : vector<1x128xf32>
    %9 = arith.mulf %5, %5 : vector<128x128xf32>
    %cst_7 = arith.constant dense<0.000000e+00> : vector<128xf32>
    %10 = vector.multi_reduction <add>, %9, %cst_7 [0] : vector<128x128xf32> to vector<128xf32>
    %11 = vector.shape_cast %10 : vector<128xf32> to vector<1x128xf32>
    %12 = arith.addf %1, %11 : vector<1x128xf32>
    %c1 = arith.constant 1 : index
    %c0_8 = arith.constant 0 : index
    %c0_9 = arith.constant 0 : index
    %13 = vector.load %arg1[%c1, %c0_8, %c0_9] : memref<4x128x36xf32, #tpu.memory_space<vmem>>, vector<1x128x36xf32>
    %14 = vector.shape_cast %13 : vector<1x128x36xf32> to vector<128x36xf32>
    %c0_10 = arith.constant 0 : index
    %c0_11 = arith.constant 0 : index
    %15 = vector.load %arg2[%c0_10, %c0_11] : memref<36x128xf32, #tpu.memory_space<vmem>>, vector<36x128xf32>
    %cst_12 = arith.constant dense<0.000000e+00> : vector<128x128xf32>
    %16 = tpu.matmul %14, %15, %cst_12 {dimension_numbers = #tpu.dot_dimension_numbers<[1], [0], [0], [1], [0, 0, 1, 1], [], []>} : vector<128x36xf32>, vector<36x128xf32>, vector<128x128xf32> -> vector<128x128xf32>
    %cst_13 = arith.constant dense<0.000000e+00> : vector<128xf32>
    %17 = vector.multi_reduction <add>, %16, %cst_13 [0] : vector<128x128xf32> to vector<128xf32>
    %18 = vector.shape_cast %17 : vector<128xf32> to vector<1x128xf32>
    %19 = arith.addf %8, %18 : vector<1x128xf32>
    %20 = arith.mulf %16, %16 : vector<128x128xf32>
    %cst_14 = arith.constant dense<0.000000e+00> : vector<128xf32>
    %21 = vector.multi_reduction <add>, %20, %cst_14 [0] : vector<128x128xf32> to vector<128xf32>
    %22 = vector.shape_cast %21 : vector<128xf32> to vector<1x128xf32>
    %23 = arith.addf %12, %22 : vector<1x128xf32>
    %c2 = arith.constant 2 : index
    %c0_15 = arith.constant 0 : index
    %c0_16 = arith.constant 0 : index
    %24 = vector.load %arg1[%c2, %c0_15, %c0_16] : memref<4x128x36xf32, #tpu.memory_space<vmem>>, vector<1x128x36xf32>
    %25 = vector.shape_cast %24 : vector<1x128x36xf32> to vector<128x36xf32>
    %c0_17 = arith.constant 0 : index
    %c0_18 = arith.constant 0 : index
    %26 = vector.load %arg2[%c0_17, %c0_18] : memref<36x128xf32, #tpu.memory_space<vmem>>, vector<36x128xf32>
    %cst_19 = arith.constant dense<0.000000e+00> : vector<128x128xf32>
    %27 = tpu.matmul %25, %26, %cst_19 {dimension_numbers = #tpu.dot_dimension_numbers<[1], [0], [0], [1], [0, 0, 1, 1], [], []>} : vector<128x36xf32>, vector<36x128xf32>, vector<128x128xf32> -> vector<128x128xf32>
    %cst_20 = arith.constant dense<0.000000e+00> : vector<128xf32>
    %28 = vector.multi_reduction <add>, %27, %cst_20 [0] : vector<128x128xf32> to vector<128xf32>
    %29 = vector.shape_cast %28 : vector<128xf32> to vector<1x128xf32>
    %30 = arith.addf %19, %29 : vector<1x128xf32>
    %31 = arith.mulf %27, %27 : vector<128x128xf32>
    %cst_21 = arith.constant dense<0.000000e+00> : vector<128xf32>
    %32 = vector.multi_reduction <add>, %31, %cst_21 [0] : vector<128x128xf32> to vector<128xf32>
    %33 = vector.shape_cast %32 : vector<128xf32> to vector<1x128xf32>
    %34 = arith.addf %23, %33 : vector<1x128xf32>
    %c3 = arith.constant 3 : index
    %c0_22 = arith.constant 0 : index
    %c0_23 = arith.constant 0 : index
    %35 = vector.load %arg1[%c3, %c0_22, %c0_23] : memref<4x128x36xf32, #tpu.memory_space<vmem>>, vector<1x128x36xf32>
    %36 = vector.shape_cast %35 : vector<1x128x36xf32> to vector<128x36xf32>
    %c0_24 = arith.constant 0 : index
    %c0_25 = arith.constant 0 : index
    %37 = vector.load %arg2[%c0_24, %c0_25] : memref<36x128xf32, #tpu.memory_space<vmem>>, vector<36x128xf32>
    %cst_26 = arith.constant dense<0.000000e+00> : vector<128x128xf32>
    %38 = tpu.matmul %36, %37, %cst_26 {dimension_numbers = #tpu.dot_dimension_numbers<[1], [0], [0], [1], [0, 0, 1, 1], [], []>} : vector<128x36xf32>, vector<36x128xf32>, vector<128x128xf32> -> vector<128x128xf32>
    %cst_27 = arith.constant dense<0.000000e+00> : vector<128xf32>
    %39 = vector.multi_reduction <add>, %38, %cst_27 [0] : vector<128x128xf32> to vector<128xf32>
    %40 = vector.shape_cast %39 : vector<128xf32> to vector<1x128xf32>
    %41 = arith.addf %30, %40 : vector<1x128xf32>
    %42 = arith.mulf %38, %38 : vector<128x128xf32>
    %cst_28 = arith.constant dense<0.000000e+00> : vector<128xf32>
    %43 = vector.multi_reduction <add>, %42, %cst_28 [0] : vector<128x128xf32> to vector<128xf32>
    %44 = vector.shape_cast %43 : vector<128xf32> to vector<1x128xf32>
    %45 = arith.addf %34, %44 : vector<1x128xf32>
    %46 = tpu.concatenate %41, %45 in 0 : vector<1x128xf32>, vector<1x128xf32> -> vector<2x128xf32>
    %47 = vector.shape_cast %46 : vector<2x128xf32> to vector<1x2x128xf32>
    %c0_29 = arith.constant 0 : index
    %c0_30 = arith.constant 0 : index
    %c0_31 = arith.constant 0 : index
    %48 = vector.load %arg3[%c0_29, %c0_30, %c0_31] : memref<1x2x128xf32, #tpu.memory_space<vmem>>, vector<1x2x128xf32>
    tpu.vector_store %arg3[%c0_29, %c0_30, %c0_31], %47 {strides = array<i32>} : memref<1x2x128xf32, #tpu.memory_space<vmem>>, vector<1x2x128xf32>,
    return
  }
  func.func @transform_0(%arg0: i32) -> (i32, i32, i32) {
    %c0_i32 = arith.constant 0 : i32
    %c0_i32_0 = arith.constant 0 : i32
    %c0_i32_1 = arith.constant 0 : i32
    return %c0_i32, %arg0, %c0_i32_0 : i32, i32, i32
  }
  func.func @transform_1(%arg0: i32) -> (i32, i32) {
    %c0_i32 = arith.constant 0 : i32
    %c0_i32_0 = arith.constant 0 : i32
    %c0_i32_1 = arith.constant 0 : i32
    return %c0_i32, %c0_i32_0 : i32, i32
  }
  func.func @transform_2(%arg0: i32) -> (i32, i32, i32) {
    %c0_i32 = arith.constant 0 : i32
    %c0_i32_0 = arith.constant 0 : i32
    %c0_i32_1 = arith.constant 0 : i32
    return %arg0, %c0_i32, %c0_i32_0 : i32, i32, i32
  }
}

</mosaic_0001>

<llo_original>
// kernel: tpu_custom_call.1
$region0: #{tpu_custom_call.1}
  #allocation0 [shape = 'u32[]', space=smem, size = 0x4, offset = 0x4, fixed_abs, tag = 'smem constant byte address 0x4 - core index']
  #allocation1 [shape = 'u32[144,128]{1,0:T(1,128)}', space=vmem, size = 0x12000, scoped, tag = 'internal scratch']
  %s0 = inlined_call_operand.vmem [shape: f32[4,128,36], index: 0, kind: input, shape index: {}]
  %s1 = inlined_call_operand.vmem [shape: f32[36,128], index: 1, kind: input, shape index: {}]
  %s2 = inlined_call_operand.hbm [shape: f32[1,2,128], index: 2, kind: output, shape index: {}]
  %s3 = sld [smem:[#allocation0]]
  $region18: #{tpu_custom_call.1} parent=0
    _
  %s5 = ssub.s32 1, %s3
  %s6 = scalar_select 0, %s5, %s3
  $region1: #{tpu_custom_call.1} parent=0
    #allocation2 [shape = 'u8[1024]{0}', space=vmem, size = 0x400, scoped, tag = 'output window, operand 0, single buffered']
    #allocation3 [shape = 's32[1]{0}', space=sflag, size = 0x4, scoped, tag = 'scoped memory for tpu_custom_call.1']
    %7 = vsyncpa [#allocation3], 0
    // Predicated region
    $region2: #{tpu_custom_call.1} parent=1 // pred_check
      _
    $region3: #{tpu_custom_call.1} parent=1 // pred_check_branch
      %9 = sbr.rel (0) target = $region5
    $region4: #{tpu_custom_call.1} parent=1 // pred_region
      _
    $region5: #{tpu_custom_call.1} parent=1 // pred_fallthru
      _
    // Predicated region
    $region6: #{tpu_custom_call.1} parent=1 // pred_check
      _
    $region7: #{tpu_custom_call.1} parent=1 // pred_check_branch
      %11 = sbr.rel (0) target = $region9
    $region8: #{tpu_custom_call.1} parent=1 // pred_region
      _
    $region9: #{tpu_custom_call.1} parent=1 // pred_fallthru
      _
    %v12 = vld [vmem:[%s0] sm:$0xff]
    %v13 = vld [vmem:[%s0 + $0x8] sm:$0xff]
    %v14 = vld [vmem:[%s0 + $0x10] sm:$0xff]
    %v15 = vld [vmem:[%s0 + $0x18] sm:$0xff]
    %v16 = vld [vmem:[%s0 + $0x20] sm:$0xff]
    %v17 = vld [vmem:[%s0 + $0x28] sm:$0xff]
    %v18 = vld [vmem:[%s0 + $0x30] sm:$0xff]
    %v19 = vld [vmem:[%s0 + $0x38] sm:$0xff]
    %v20 = vld [vmem:[%s0 + $0x40] sm:$0xff]
    %v21 = vld [vmem:[%s0 + $0x48] sm:$0xff]
    %v22 = vld [vmem:[%s0 + $0x50] sm:$0xff]
    %v23 = vld [vmem:[%s0 + $0x58] sm:$0xff]
    %v24 = vld [vmem:[%s0 + $0x60] sm:$0xff]
    %v25 = vld [vmem:[%s0 + $0x68] sm:$0xff]
    %v26 = vld [vmem:[%s0 + $0x70] sm:$0xff]
    %v27 = vld [vmem:[%s0 + $0x78] sm:$0xff]
    %v28 = vld [vmem:[%s1] sm:$0xff]
    %v29 = vld [vmem:[%s1 + $0x8] sm:$0xff]
    %v30 = vld [vmem:[%s1 + $0x10] sm:$0xff]
    %v31 = vld [vmem:[%s1 + $0x18] sm:$0xff]
    %v32 = vld [vmem:[%s1 + $0x20] sm:$0xf]
    %vm33 = vcmask 293888
    %v35 = vsel %vm33, %v12, 0
    %v38 = vsel %vm33, %v13, 0
    %v41 = vsel %vm33, %v14, 0
    %v44 = vsel %vm33, %v15, 0
    %v47 = vsel %vm33, %v16, 0
    %v50 = vsel %vm33, %v17, 0
    %v53 = vsel %vm33, %v18, 0
    %v56 = vsel %vm33, %v19, 0
    %v59 = vsel %vm33, %v20, 0
    %v62 = vsel %vm33, %v21, 0
    %v65 = vsel %vm33, %v22, 0
    %v68 = vsel %vm33, %v23, 0
    %v71 = vsel %vm33, %v24, 0
    %v74 = vsel %vm33, %v25, 0
    %v77 = vsel %vm33, %v26, 0
    %v80 = vsel %vm33, %v27, 0
    %vm82 = vcmask 1043456
    %v84 = vsel %vm82, %v32, 0
    %86 = vmatprep.subr.mxu0 0.0
    %87 = vmatpush1.msra.mxu0 %v28
    %88 = vmatprep.subr.mxu0 0.0
    %89 = vmatpush1.msra.mxu0 %v29
    %90 = vmatprep.subr.mxu0 0.0
    %91 = vmatpush1.msra.mxu0 %v30
    %92 = vmatprep.subr.mxu0 0.0
    %93 = vmatpush1.msra.mxu0 %v31
    %94 = vmatprep.subr.mxu0 0.0
    %95 = vmatpush1.msra.mxu0 %v84
    %96 = vmatprep.subr.mxu0 0.0
    %97 = vmatpush1.msra.mxu0 0.0
    %98 = vmatprep.subr.mxu0 0.0
    %99 = vmatpush1.msra.mxu0 0.0
    %100 = vmatprep.subr.mxu0 0.0
    %101 = vmatpush1.msra.mxu0 0.0
    %102 = vmatprep.subr.mxu0 0.0
    %103 = vmatpush1.msra.mxu0 0.0
    %104 = vmatprep.subr.mxu0 0.0
    %105 = vmatpush1.msra.mxu0 0.0
    %106 = vmatprep.subr.mxu0 0.0
    %107 = vmatpush1.msra.mxu0 0.0
    %108 = vmatprep.subr.mxu0 0.0
    %109 = vmatpush1.msra.mxu0 0.0
    %110 = vmatprep.subr.mxu0 0.0
    %111 = vmatpush1.msra.mxu0 0.0
    %112 = vmatprep.subr.mxu0 0.0
    %113 = vmatpush1.msra.mxu0 0.0
    %114 = vmatprep.subr.mxu0 0.0
    %115 = vmatpush1.msra.mxu0 0.0
    %116 = vmatprep.subr.mxu0 0.0
    %117 = vmatpush1.msra.mxu0 0.0
    %118 = vmatprep.subr.mxu0 0.0
    %119 = vmatpush1.msra.mxu0 0.0
    %120 = vmatprep.subr.mxu0 0.0
    %121 = vmatpush1.msra.mxu0 0.0
    %122 = vmatprep.subr.mxu0 0.0
    %123 = vmatpush1.msra.mxu0 0.0
    %124 = vmatprep.subr.mxu0 0.0
    %125 = vmatpush1.msra.mxu0 0.0
    %126 = vmatprep.subr.mxu0 0.0
    %127 = vmatpush1.msra.mxu0 0.0
    %128 = vmatprep.subr.mxu0 0.0
    %129 = vmatpush1.msra.mxu0 0.0
    %130 = vmatprep.subr.mxu0 0.0
    %131 = vmatpush1.msra.mxu0 0.0
    %132 = vmatprep.subr.mxu0 0.0
    %133 = vmatpush1.msra.mxu0 0.0
    %134 = vmatprep.subr.mxu0 0.0
    %135 = vmatpush1.msra.mxu0 0.0
    %136 = vmatprep.subr.mxu0 0.0
    %137 = vmatpush1.msra.mxu0 0.0
    %138 = vmatprep.subr.mxu0 0.0
    %139 = vmatpush1.msra.mxu0 0.0
    %140 = vmatprep.subr.mxu0 0.0
    %141 = vmatpush1.msra.mxu0 0.0
    %142 = vmatprep.subr.mxu0 0.0
    %143 = vmatpush1.msra.mxu0 0.0
    %144 = vmatprep.subr.mxu0 0.0
    %145 = vmatpush1.msra.mxu0 0.0
    %146 = vmatprep.subr.mxu0 0.0
    %147 = vmatpush1.msra.mxu0 0.0
    %148 = vmatprep.subr.mxu0 0.0
    %149 = vmatpush1.msra.mxu0 0.0
    %150 = vmatprep.mubr.f32.mxu0 0.0
    %151 = vmatmul.mubr.f32.gmra.mrb[0].mxu0 %v35
    %v152 = vpop.f32.mrb[0].mxu0
    %v153 = vadd.f32 0.0, %v152
    %v154 = vpop.f32.mrb[0].mxu0
    %155 = vmatprep.mubr.f32.mxu0 0.0
    %156 = vmatmul.mubr.f32.gmra.mrb[0].mxu0 %v38
    %v157 = vpop.f32.mrb[0].mxu0
    %v158 = vadd.f32 0.0, %v157
    %v159 = vpop.f32.mrb[0].mxu0
    %160 = vmatprep.mubr.f32.mxu0 0.0
    %161 = vmatmul.mubr.f32.gmra.mrb[0].mxu0 %v41
    %v162 = vpop.f32.mrb[0].mxu0
    %v163 = vadd.f32 0.0, %v162
    %v164 = vpop.f32.mrb[0].mxu0
    %165 = vmatprep.mubr.f32.mxu0 0.0
    %166 = vmatmul.mubr.f32.gmra.mrb[0].mxu0 %v44
    %v167 = vpop.f32.mrb[0].mxu0
    %v168 = vadd.f32 0.0, %v167
    %v169 = vpop.f32.mrb[0].mxu0
    %170 = vmatprep.mubr.f32.mxu0 0.0
    %171 = vmatmul.mubr.f32.gmra.mrb[0].mxu0 %v47
    %v172 = vpop.f32.mrb[0].mxu0
    %v173 = vadd.f32 0.0, %v172
    %v174 = vpop.f32.mrb[0].mxu0
    %175 = vmatprep.mubr.f32.mxu0 0.0
    %176 = vmatmul.mubr.f32.gmra.mrb[0].mxu0 %v50
    %v177 = vpop.f32.mrb[0].mxu0
    %v178 = vadd.f32 0.0, %v177
    %v179 = vpop.f32.mrb[0].mxu0
    %180 = vmatprep.mubr.f32.mxu0 0.0
    %181 = vmatmul.mubr.f32.gmra.mrb[0].mxu0 %v53
    %v182 = vpop.f32.mrb[0].mxu0
    %v183 = vadd.f32 0.0, %v182
    %v184 = vpop.f32.mrb[0].mxu0
    %185 = vmatprep.mubr.f32.mxu0 0.0
    %186 = vmatmul.mubr.f32.gmra.mrb[0].mxu0 %v56
    %v187 = vpop.f32.mrb[0].mxu0
    %v188 = vadd.f32 0.0, %v187
    %v189 = vpop.f32.mrb[0].mxu0
    %190 = vmatprep.mubr.f32.mxu0 0.0
    %191 = vmatmul.mubr.f32.gmra.mrb[0].mxu0 %v59
    %v192 = vpop.f32.mrb[0].mxu0
    %v193 = vadd.f32 0.0, %v192
    %v194 = vpop.f32.mrb[0].mxu0
    %195 = vmatprep.mubr.f32.mxu0 0.0
    %196 = vmatmul.mubr.f32.gmra.mrb[0].mxu0 %v62
    %v197 = vpop.f32.mrb[0].mxu0
    %v198 = vadd.f32 0.0, %v197
    %v199 = vpop.f32.mrb[0].mxu0
    %200 = vmatprep.mubr.f32.mxu0 0.0
    %201 = vmatmul.mubr.f32.gmra.mrb[0].mxu0 %v65
    %v202 = vpop.f32.mrb[0].mxu0
    %v203 = vadd.f32 0.0, %v202
    %v204 = vpop.f32.mrb[0].mxu0
    %205 = vmatprep.mubr.f32.mxu0 0.0
    %206 = vmatmul.mubr.f32.gmra.mrb[0].mxu0 %v68
    %v207 = vpop.f32.mrb[0].mxu0
    %v208 = vadd.f32 0.0, %v207
    %v209 = vpop.f32.mrb[0].mxu0
    %210 = vmatprep.mubr.f32.mxu0 0.0
    %211 = vmatmul.mubr.f32.gmra.mrb[0].mxu0 %v71
    %v212 = vpop.f32.mrb[0].mxu0
    %v213 = vadd.f32 0.0, %v212
    %v214 = vpop.f32.mrb[0].mxu0
    %215 = vmatprep.mubr.f32.mxu0 0.0
    %216 = vmatmul.mubr.f32.gmra.mrb[0].mxu0 %v74
    %v217 = vpop.f32.mrb[0].mxu0
    %v218 = vadd.f32 0.0, %v217
    %v219 = vpop.f32.mrb[0].mxu0
    %220 = vmatprep.mubr.f32.mxu0 0.0
    %221 = vmatmul.mubr.f32.gmra.mrb[0].mxu0 %v77
    %v222 = vpop.f32.mrb[0].mxu0
    %v223 = vadd.f32 0.0, %v222
    %v224 = vpop.f32.mrb[0].mxu0
    %225 = vmatprep.mubr.f32.mxu0 0.0
    %226 = vmatmul.mubr.f32.gmra.mrb[0].mxu0 %v80
    %v227 = vpop.f32.mrb[0].mxu0
    %v228 = vadd.f32 0.0, %v227
    %v229 = vpop.f32.mrb[0].mxu0
    %230 = vdwg.mxu0
    %v231 = vadd.f32 %v153, %v158
    %v232 = vadd.f32 %v231, %v163
    %v233 = vadd.f32 %v232, %v168
    %v234 = vadd.f32 %v233, %v173
    %v235 = vadd.f32 %v234, %v178
    %v236 = vadd.f32 %v235, %v183
    %v237 = vadd.f32 %v236, %v188
    %v238 = vadd.f32 %v237, %v193
    %v239 = vadd.f32 %v238, %v198
    %v240 = vadd.f32 %v239, %v203
    %v241 = vadd.f32 %v240, %v208
    %v242 = vadd.f32 %v241, %v213
    %v243 = vadd.f32 %v242, %v218
    %v244 = vadd.f32 %v243, %v223
    %v245 = vadd.f32 %v244, %v228
    %v246 = vrot.slane %v245, 4
    %v247 = vadd.f32 %v245, %v246
    %v248 = vrot.slane %v247, 2
    %v249 = vadd.f32 %v247, %v248
    %v250 = vrot.slane %v249, 1
    %v251 = vadd.f32 %v249, %v250
    %v252 = vadd.f32 %v251, 0.0
    %v253 = vmul.f32 %v153, %v153
    %v254 = vmul.f32 %v158, %v158
    %v255 = vmul.f32 %v163, %v163
    %v256 = vmul.f32 %v168, %v168
    %v257 = vmul.f32 %v173, %v173
    %v258 = vmul.f32 %v178, %v178
    %v259 = vmul.f32 %v183, %v183
    %v260 = vmul.f32 %v188, %v188
    %v261 = vmul.f32 %v193, %v193
    %v262 = vmul.f32 %v198, %v198
    %v263 = vmul.f32 %v203, %v203
    %v264 = vmul.f32 %v208, %v208
    %v265 = vmul.f32 %v213, %v213
    %v266 = vmul.f32 %v218, %v218
    %v267 = vmul.f32 %v223, %v223
    %v268 = vmul.f32 %v228, %v228
    %v269 = vadd.f32 %v253, %v254
    %v270 = vadd.f32 %v269, %v255
    %v271 = vadd.f32 %v270, %v256
    %v272 = vadd.f32 %v271, %v257
    %v273 = vadd.f32 %v272, %v258
    %v274 = vadd.f32 %v273, %v259
    %v275 = vadd.f32 %v274, %v260
    %v276 = vadd.f32 %v275, %v261
    %v277 = vadd.f32 %v276, %v262
    %v278 = vadd.f32 %v277, %v263
    %v279 = vadd.f32 %v278, %v264
    %v280 = vadd.f32 %v279, %v265
    %v281 = vadd.f32 %v280, %v266
    %v282 = vadd.f32 %v281, %v267
    %v283 = vadd.f32 %v282, %v268
    %v284 = vrot.slane %v283, 4
    %v285 = vadd.f32 %v283, %v284
    %v286 = vrot.slane %v285, 2
    %v287 = vadd.f32 %v285, %v286
    %v288 = vrot.slane %v287, 1
    %v289 = vadd.f32 %v287, %v288
    %v290 = vadd.f32 %v289, 0.0
    %s291 = scalar_lea.vmem %s0, 128
    %v292 = vld [vmem:[%s291] sm:$0xff]
    %v293 = vld [vmem:[%s291 + $0x8] sm:$0xff]
    %v294 = vld [vmem:[%s291 + $0x10] sm:$0xff]
    %v295 = vld [vmem:[%s291 + $0x18] sm:$0xff]
    %v296 = vld [vmem:[%s291 + $0x20] sm:$0xff]
    %v297 = vld [vmem:[%s291 + $0x28] sm:$0xff]
    %v298 = vld [vmem:[%s291 + $0x30] sm:$0xff]
    %v299 = vld [vmem:[%s291 + $0x38] sm:$0xff]
    %v300 = vld [vmem:[%s291 + $0x40] sm:$0xff]
    %v301 = vld [vmem:[%s291 + $0x48] sm:$0xff]
    %v302 = vld [vmem:[%s291 + $0x50] sm:$0xff]
    %v303 = vld [vmem:[%s291 + $0x58] sm:$0xff]
    %v304 = vld [vmem:[%s291 + $0x60] sm:$0xff]
    %v305 = vld [vmem:[%s291 + $0x68] sm:$0xff]
    %v306 = vld [vmem:[%s291 + $0x70] sm:$0xff]
    %v307 = vld [vmem:[%s291 + $0x78] sm:$0xff]
    %v309 = vsel %vm33, %v292, 0
    %v312 = vsel %vm33, %v293, 0
    %v315 = vsel %vm33, %v294, 0
    %v318 = vsel %vm33, %v295, 0
    %v321 = vsel %vm33, %v296, 0
    %v324 = vsel %vm33, %v297, 0
    %v327 = vsel %vm33, %v298, 0
    %v330 = vsel %vm33, %v299, 0
    %v333 = vsel %vm33, %v300, 0
    %v336 = vsel %vm33, %v301, 0
    %v339 = vsel %vm33, %v302, 0
    %v342 = vsel %vm33, %v303, 0
    %v345 = vsel %vm33, %v304, 0
    %v348 = vsel %vm33, %v305, 0
    %v351 = vsel %vm33, %v306, 0
    %v354 = vsel %vm33, %v307, 0
    %356 = vmatprep.subr.mxu0 0.0
    %357 = vmatpush1.msra.mxu0 %v28
    %358 = vmatprep.subr.mxu0 0.0
    %359 = vmatpush1.msra.mxu0 %v29
    %360 = vmatprep.subr.mxu0 0.0
    %361 = vmatpush1.msra.mxu0 %v30
    %362 = vmatprep.subr.mxu0 0.0
    %363 = vmatpush1.msra.mxu0 %v31
    %364 = vmatprep.subr.mxu0 0.0
    %365 = vmatpush1.msra.mxu0 %v84
    %366 = vmatprep.subr.mxu0 0.0
    %367 = vmatpush1.msra.mxu0 0.0
    %368 = vmatprep.subr.mxu0 0.0
    %369 = vmatpush1.msra.mxu0 0.0
    %370 = vmatprep.subr.mxu0 0.0
    %371 = vmatpush1.msra.mxu0 0.0
    %372 = vmatprep.subr.mxu0 0.0
    %373 = vmatpush1.msra.mxu0 0.0
    %374 = vmatprep.subr.mxu0 0.0
    %375 = vmatpush1.msra.mxu0 0.0
    %376 = vmatprep.subr.mxu0 0.0
    %377 = vmatpush1.msra.mxu0 0.0
    %378 = vmatprep.subr.mxu0 0.0
    %379 = vmatpush1.msra.mxu0 0.0
    %380 = vmatprep.subr.mxu0 0.0
    %381 = vmatpush1.msra.mxu0 0.0
    %382 = vmatprep.subr.mxu0 0.0
    %383 = vmatpush1.msra.mxu0 0.0
    %384 = vmatprep.subr.mxu0 0.0
    %385 = vmatpush1.msra.mxu0 0.0
    %386 = vmatprep.subr.mxu0 0.0
    %387 = vmatpush1.msra.mxu0 0.0
    %388 = vmatprep.subr.mxu0 0.0
    %389 = vmatpush1.msra.mxu0 0.0
    %390 = vmatprep.subr.mxu0 0.0
    %391 = vmatpush1.msra.mxu0 0.0
    %392 = vmatprep.subr.mxu0 0.0
    %393 = vmatpush1.msra.mxu0 0.0
    %394 = vmatprep.subr.mxu0 0.0
    %395 = vmatpush1.msra.mxu0 0.0
    %396 = vmatprep.subr.mxu0 0.0
    %397 = vmatpush1.msra.mxu0 0.0
    %398 = vmatprep.subr.mxu0 0.0
    %399 = vmatpush1.msra.mxu0 0.0
    %400 = vmatprep.subr.mxu0 0.0
    %401 = vmatpush1.msra.mxu0 0.0
    %402 = vmatprep.subr.mxu0 0.0
    %403 = vmatpush1.msra.mxu0 0.0
    %404 = vmatprep.subr.mxu0 0.0
    %405 = vmatpush1.msra.mxu0 0.0
    %406 = vmatprep.subr.mxu0 0.0
    %407 = vmatpush1.msra.mxu0 0.0
    %408 = vmatprep.subr.mxu0 0.0
    %409 = vmatpush1.msra.mxu0 0.0
    %410 = vmatprep.subr.mxu0 0.0
    %411 = vmatpush1.msra.mxu0 0.0
    %412 = vmatprep.subr.mxu0 0.0
    %413 = vmatpush1.msra.mxu0 0.0
    %414 = vmatprep.subr.mxu0 0.0
    %415 = vmatpush1.msra.mxu0 0.0
    %416 = vmatprep.subr.mxu0 0.0
    %417 = vmatpush1.msra.mxu0 0.0
    %418 = vmatprep.subr.mxu0 0.0
    %419 = vmatpush1.msra.mxu0 0.0
    %420 = vmatprep.mubr.f32.mxu0 0.0
    %421 = vmatmul.mubr.f32.gmra.mrb[0].mxu0 %v309
    %v422 = vpop.f32.mrb[0].mxu0
    %v423 = vadd.f32 0.0, %v422
    %v424 = vpop.f32.mrb[0].mxu0
    %425 = vmatprep.mubr.f32.mxu0 0.0
    %426 = vmatmul.mubr.f32.gmra.mrb[0].mxu0 %v312
    %v427 = vpop.f32.mrb[0].mxu0
    %v428 = vadd.f32 0.0, %v427
    %v429 = vpop.f32.mrb[0].mxu0
    %430 = vmatprep.mubr.f32.mxu0 0.0
    %431 = vmatmul.mubr.f32.gmra.mrb[0].mxu0 %v315
    %v432 = vpop.f32.mrb[0].mxu0
    %v433 = vadd.f32 0.0, %v432
    %v434 = vpop.f32.mrb[0].mxu0
    %435 = vmatprep.mubr.f32.mxu0 0.0
    %436 = vmatmul.mubr.f32.gmra.mrb[0].mxu0 %v318
    %v437 = vpop.f32.mrb[0].mxu0
    %v438 = vadd.f32 0.0, %v437
    %v439 = vpop.f32.mrb[0].mxu0
    %440 = vmatprep.mubr.f32.mxu0 0.0
    %441 = vmatmul.mubr.f32.gmra.mrb[0].mxu0 %v321
    %v442 = vpop.f32.mrb[0].mxu0
    %v443 = vadd.f32 0.0, %v442
    %v444 = vpop.f32.mrb[0].mxu0
    %445 = vmatprep.mubr.f32.mxu0 0.0
    %446 = vmatmul.mubr.f32.gmra.mrb[0].mxu0 %v324
    %v447 = vpop.f32.mrb[0].mxu0
    %v448 = vadd.f32 0.0, %v447
    %v449 = vpop.f32.mrb[0].mxu0
    %450 = vmatprep.mubr.f32.mxu0 0.0
    %451 = vmatmul.mubr.f32.gmra.mrb[0].mxu0 %v327
    %v452 = vpop.f32.mrb[0].mxu0
    %v453 = vadd.f32 0.0, %v452
    %v454 = vpop.f32.mrb[0].mxu0
    %455 = vmatprep.mubr.f32.mxu0 0.0
    %456 = vmatmul.mubr.f32.gmra.mrb[0].mxu0 %v330
    %v457 = vpop.f32.mrb[0].mxu0
    %v458 = vadd.f32 0.0, %v457
    %v459 = vpop.f32.mrb[0].mxu0
    %460 = vmatprep.mubr.f32.mxu0 0.0
    %461 = vmatmul.mubr.f32.gmra.mrb[0].mxu0 %v333
    %v462 = vpop.f32.mrb[0].mxu0
    %v463 = vadd.f32 0.0, %v462
    %v464 = vpop.f32.mrb[0].mxu0
    %465 = vmatprep.mubr.f32.mxu0 0.0
    %466 = vmatmul.mubr.f32.gmra.mrb[0].mxu0 %v336
    %v467 = vpop.f32.mrb[0].mxu0
    %v468 = vadd.f32 0.0, %v467
    %v469 = vpop.f32.mrb[0].mxu0
    %470 = vmatprep.mubr.f32.mxu0 0.0
    %471 = vmatmul.mubr.f32.gmra.mrb[0].mxu0 %v339
    %v472 = vpop.f32.mrb[0].mxu0
    %v473 = vadd.f32 0.0, %v472
    %v474 = vpop.f32.mrb[0].mxu0
    %475 = vmatprep.mubr.f32.mxu0 0.0
    %476 = vmatmul.mubr.f32.gmra.mrb[0].mxu0 %v342
    %v477 = vpop.f32.mrb[0].mxu0
    %v478 = vadd.f32 0.0, %v477
    %v479 = vpop.f32.mrb[0].mxu0
    %480 = vmatprep.mubr.f32.mxu0 0.0
    %481 = vmatmul.mubr.f32.gmra.mrb[0].mxu0 %v345
    %v482 = vpop.f32.mrb[0].mxu0
    %v483 = vadd.f32 0.0, %v482
    %v484 = vpop.f32.mrb[0].mxu0
    %485 = vmatprep.mubr.f32.mxu0 0.0
    %486 = vmatmul.mubr.f32.gmra.mrb[0].mxu0 %v348
    %v487 = vpop.f32.mrb[0].mxu0
    %v488 = vadd.f32 0.0, %v487
    %v489 = vpop.f32.mrb[0].mxu0
    %490 = vmatprep.mubr.f32.mxu0 0.0
    %491 = vmatmul.mubr.f32.gmra.mrb[0].mxu0 %v351
    %v492 = vpop.f32.mrb[0].mxu0
    %v493 = vadd.f32 0.0, %v492
    %v494 = vpop.f32.mrb[0].mxu0
    %495 = vmatprep.mubr.f32.mxu0 0.0
    %496 = vmatmul.mubr.f32.gmra.mrb[0].mxu0 %v354
    %v497 = vpop.f32.mrb[0].mxu0
    %v498 = vadd.f32 0.0, %v497
    %v499 = vpop.f32.mrb[0].mxu0
    %500 = vdwg.mxu0
    %v501 = vadd.f32 %v423, %v428
    %v502 = vadd.f32 %v501, %v433
    %v503 = vadd.f32 %v502, %v438
    %v504 = vadd.f32 %v503, %v443
    %v505 = vadd.f32 %v504, %v448
    %v506 = vadd.f32 %v505, %v453
    %v507 = vadd.f32 %v506, %v458
    %v508 = vadd.f32 %v507, %v463
    %v509 = vadd.f32 %v508, %v468
    %v510 = vadd.f32 %v509, %v473
    %v511 = vadd.f32 %v510, %v478
    %v512 = vadd.f32 %v511, %v483
    %v513 = vadd.f32 %v512, %v488
    %v514 = vadd.f32 %v513, %v493
    %v515 = vadd.f32 %v514, %v498
    %v516 = vrot.slane %v515, 4
    %v517 = vadd.f32 %v515, %v516
    %v518 = vrot.slane %v517, 2
    %v519 = vadd.f32 %v517, %v518
    %v520 = vrot.slane %v519, 1
    %v521 = vadd.f32 %v519, %v520
    %v522 = vadd.f32 %v252, %v521
    %v523 = vmul.f32 %v423, %v423
    %v524 = vmul.f32 %v428, %v428
    %v525 = vmul.f32 %v433, %v433
    %v526 = vmul.f32 %v438, %v438
    %v527 = vmul.f32 %v443, %v443
    %v528 = vmul.f32 %v448, %v448
    %v529 = vmul.f32 %v453, %v453
    %v530 = vmul.f32 %v458, %v458
    %v531 = vmul.f32 %v463, %v463
    %v532 = vmul.f32 %v468, %v468
    %v533 = vmul.f32 %v473, %v473
    %v534 = vmul.f32 %v478, %v478
    %v535 = vmul.f32 %v483, %v483
    %v536 = vmul.f32 %v488, %v488
    %v537 = vmul.f32 %v493, %v493
    %v538 = vmul.f32 %v498, %v498
    %v539 = vadd.f32 %v523, %v524
    %v540 = vadd.f32 %v539, %v525
    %v541 = vadd.f32 %v540, %v526
    %v542 = vadd.f32 %v541, %v527
    %v543 = vadd.f32 %v542, %v528
    %v544 = vadd.f32 %v543, %v529
    %v545 = vadd.f32 %v544, %v530
    %v546 = vadd.f32 %v545, %v531
    %v547 = vadd.f32 %v546, %v532
    %v548 = vadd.f32 %v547, %v533
    %v549 = vadd.f32 %v548, %v534
    %v550 = vadd.f32 %v549, %v535
    %v551 = vadd.f32 %v550, %v536
    %v552 = vadd.f32 %v551, %v537
    %v553 = vadd.f32 %v552, %v538
    %v554 = vrot.slane %v553, 4
    %v555 = vadd.f32 %v553, %v554
    %v556 = vrot.slane %v555, 2
    %v557 = vadd.f32 %v555, %v556
    %v558 = vrot.slane %v557, 1
    %v559 = vadd.f32 %v557, %v558
    %v560 = vadd.f32 %v290, %v559
    %s561 = scalar_lea.vmem %s0, 256
    %v562 = vld [vmem:[%s561] sm:$0xff]
    %v563 = vld [vmem:[%s561 + $0x8] sm:$0xff]
    %v564 = vld [vmem:[%s561 + $0x10] sm:$0xff]
    %v565 = vld [vmem:[%s561 + $0x18] sm:$0xff]
    %v566 = vld [vmem:[%s561 + $0x20] sm:$0xff]
    %v567 = vld [vmem:[%s561 + $0x28] sm:$0xff]
    %v568 = vld [vmem:[%s561 + $0x30] sm:$0xff]
    %v569 = vld [vmem:[%s561 + $0x38] sm:$0xff]
    %v570 = vld [vmem:[%s561 + $0x40] sm:$0xff]
    %v571 = vld [vmem:[%s561 + $0x48] sm:$0xff]
    %v572 = vld [vmem:[%s561 + $0x50] sm:$0xff]
    %v573 = vld [vmem:[%s561 + $0x58] sm:$0xff]
    %v574 = vld [vmem:[%s561 + $0x60] sm:$0xff]
    %v575 = vld [vmem:[%s561 + $0x68] sm:$0xff]
    %v576 = vld [vmem:[%s561 + $0x70] sm:$0xff]
    %v577 = vld [vmem:[%s561 + $0x78] sm:$0xff]
    %v579 = vsel %vm33, %v562, 0
    %v582 = vsel %vm33, %v563, 0
    %v585 = vsel %vm33, %v564, 0
    %v588 = vsel %vm33, %v565, 0
    %v591 = vsel %vm33, %v566, 0
    %v594 = vsel %vm33, %v567, 0
    %v597 = vsel %vm33, %v568, 0
    %v600 = vsel %vm33, %v569, 0
    %v603 = vsel %vm33, %v570, 0
    %v606 = vsel %vm33, %v571, 0
    %v609 = vsel %vm33, %v572, 0
    %v612 = vsel %vm33, %v573, 0
    %v615 = vsel %vm33, %v574, 0
    %v618 = vsel %vm33, %v575, 0
    %v621 = vsel %vm33, %v576, 0
    %v624 = vsel %vm33, %v577, 0
    %626 = vmatprep.subr.mxu0 0.0
    %627 = vmatpush1.msra.mxu0 %v28
    %628 = vmatprep.subr.mxu0 0.0
    %629 = vmatpush1.msra.mxu0 %v29
    %630 = vmatprep.subr.mxu0 0.0
    %631 = vmatpush1.msra.mxu0 %v30
    %632 = vmatprep.subr.mxu0 0.0
    %633 = vmatpush1.msra.mxu0 %v31
    %634 = vmatprep.subr.mxu0 0.0
    %635 = vmatpush1.msra.mxu0 %v84
    %636 = vmatprep.subr.mxu0 0.0
    %637 = vmatpush1.msra.mxu0 0.0
    %638 = vmatprep.subr.mxu0 0.0
    %639 = vmatpush1.msra.mxu0 0.0
    %640 = vmatprep.subr.mxu0 0.0
    %641 = vmatpush1.msra.mxu0 0.0
    %642 = vmatprep.subr.mxu0 0.0
    %643 = vmatpush1.msra.mxu0 0.0
    %644 = vmatprep.subr.mxu0 0.0
    %645 = vmatpush1.msra.mxu0 0.0
    %646 = vmatprep.subr.mxu0 0.0
    %647 = vmatpush1.msra.mxu0 0.0
    %648 = vmatprep.subr.mxu0 0.0
    %649 = vmatpush1.msra.mxu0 0.0
    %650 = vmatprep.subr.mxu0 0.0
    %651 = vmatpush1.msra.mxu0 0.0
    %652 = vmatprep.subr.mxu0 0.0
    %653 = vmatpush1.msra.mxu0 0.0
    %654 = vmatprep.subr.mxu0 0.0
    %655 = vmatpush1.msra.mxu0 0.0
    %656 = vmatprep.subr.mxu0 0.0
    %657 = vmatpush1.msra.mxu0 0.0
    %658 = vmatprep.subr.mxu0 0.0
    %659 = vmatpush1.msra.mxu0 0.0
    %660 = vmatprep.subr.mxu0 0.0
    %661 = vmatpush1.msra.mxu0 0.0
    %662 = vmatprep.subr.mxu0 0.0
    %663 = vmatpush1.msra.mxu0 0.0
    %664 = vmatprep.subr.mxu0 0.0
    %665 = vmatpush1.msra.mxu0 0.0
    %666 = vmatprep.subr.mxu0 0.0
    %667 = vmatpush1.msra.mxu0 0.0
    %668 = vmatprep.subr.mxu0 0.0
    %669 = vmatpush1.msra.mxu0 0.0
    %670 = vmatprep.subr.mxu0 0.0
    %671 = vmatpush1.msra.mxu0 0.0
    %672 = vmatprep.subr.mxu0 0.0
    %673 = vmatpush1.msra.mxu0 0.0
    %674 = vmatprep.subr.mxu0 0.0
    %675 = vmatpush1.msra.mxu0 0.0
    %676 = vmatprep.subr.mxu0 0.0
    %677 = vmatpush1.msra.mxu0 0.0
    %678 = vmatprep.subr.mxu0 0.0
    %679 = vmatpush1.msra.mxu0 0.0
    %680 = vmatprep.subr.mxu0 0.0
    %681 = vmatpush1.msra.mxu0 0.0
    %682 = vmatprep.subr.mxu0 0.0
    %683 = vmatpush1.msra.mxu0 0.0
    %684 = vmatprep.subr.mxu0 0.0
    %685 = vmatpush1.msra.mxu0 0.0
    %686 = vmatprep.subr.mxu0 0.0
    %687 = vmatpush1.msra.mxu0 0.0
    %688 = vmatprep.subr.mxu0 0.0
    %689 = vmatpush1.msra.mxu0 0.0
    %690 = vmatprep.mubr.f32.mxu0 0.0
    %691 = vmatmul.mubr.f32.gmra.mrb[0].mxu0 %v579
    %v692 = vpop.f32.mrb[0].mxu0
    %v693 = vadd.f32 0.0, %v692
    %v694 = vpop.f32.mrb[0].mxu0
    %695 = vmatprep.mubr.f32.mxu0 0.0
    %696 = vmatmul.mubr.f32.gmra.mrb[0].mxu0 %v582
    %v697 = vpop.f32.mrb[0].mxu0
    %v698 = vadd.f32 0.0, %v697
    %v699 = vpop.f32.mrb[0].mxu0
    %700 = vmatprep.mubr.f32.mxu0 0.0
    %701 = vmatmul.mubr.f32.gmra.mrb[0].mxu0 %v585
    %v702 = vpop.f32.mrb[0].mxu0
    %v703 = vadd.f32 0.0, %v702
    %v704 = vpop.f32.mrb[0].mxu0
    %705 = vmatprep.mubr.f32.mxu0 0.0
    %706 = vmatmul.mubr.f32.gmra.mrb[0].mxu0 %v588
    %v707 = vpop.f32.mrb[0].mxu0
    %v708 = vadd.f32 0.0, %v707
    %v709 = vpop.f32.mrb[0].mxu0
    %710 = vmatprep.mubr.f32.mxu0 0.0
    %711 = vmatmul.mubr.f32.gmra.mrb[0].mxu0 %v591
    %v712 = vpop.f32.mrb[0].mxu0
    %v713 = vadd.f32 0.0, %v712
    %v714 = vpop.f32.mrb[0].mxu0
    %715 = vmatprep.mubr.f32.mxu0 0.0
    %716 = vmatmul.mubr.f32.gmra.mrb[0].mxu0 %v594
    %v717 = vpop.f32.mrb[0].mxu0
    %v718 = vadd.f32 0.0, %v717
    %v719 = vpop.f32.mrb[0].mxu0
    %720 = vmatprep.mubr.f32.mxu0 0.0
    %721 = vmatmul.mubr.f32.gmra.mrb[0].mxu0 %v597
    %v722 = vpop.f32.mrb[0].mxu0
    %v723 = vadd.f32 0.0, %v722
    %v724 = vpop.f32.mrb[0].mxu0
    %725 = vmatprep.mubr.f32.mxu0 0.0
    %726 = vmatmul.mubr.f32.gmra.mrb[0].mxu0 %v600
    %v727 = vpop.f32.mrb[0].mxu0
    %v728 = vadd.f32 0.0, %v727
    %v729 = vpop.f32.mrb[0].mxu0
    %730 = vmatprep.mubr.f32.mxu0 0.0
    %731 = vmatmul.mubr.f32.gmra.mrb[0].mxu0 %v603
    %v732 = vpop.f32.mrb[0].mxu0
    %v733 = vadd.f32 0.0, %v732
    %v734 = vpop.f32.mrb[0].mxu0
    %735 = vmatprep.mubr.f32.mxu0 0.0
    %736 = vmatmul.mubr.f32.gmra.mrb[0].mxu0 %v606
    %v737 = vpop.f32.mrb[0].mxu0
    %v738 = vadd.f32 0.0, %v737
    %v739 = vpop.f32.mrb[0].mxu0
    %740 = vmatprep.mubr.f32.mxu0 0.0
    %741 = vmatmul.mubr.f32.gmra.mrb[0].mxu0 %v609
    %v742 = vpop.f32.mrb[0].mxu0
    %v743 = vadd.f32 0.0, %v742
    %v744 = vpop.f32.mrb[0].mxu0
    %745 = vmatprep.mubr.f32.mxu0 0.0
    %746 = vmatmul.mubr.f32.gmra.mrb[0].mxu0 %v612
    %v747 = vpop.f32.mrb[0].mxu0
    %v748 = vadd.f32 0.0, %v747
    %v749 = vpop.f32.mrb[0].mxu0
    %750 = vmatprep.mubr.f32.mxu0 0.0
    %751 = vmatmul.mubr.f32.gmra.mrb[0].mxu0 %v615
    %v752 = vpop.f32.mrb[0].mxu0
    %v753 = vadd.f32 0.0, %v752
    %v754 = vpop.f32.mrb[0].mxu0
    %755 = vmatprep.mubr.f32.mxu0 0.0
    %756 = vmatmul.mubr.f32.gmra.mrb[0].mxu0 %v618
    %v757 = vpop.f32.mrb[0].mxu0
    %v758 = vadd.f32 0.0, %v757
    %v759 = vpop.f32.mrb[0].mxu0
    %760 = vmatprep.mubr.f32.mxu0 0.0
    %761 = vmatmul.mubr.f32.gmra.mrb[0].mxu0 %v621
    %v762 = vpop.f32.mrb[0].mxu0
    %v763 = vadd.f32 0.0, %v762
    %v764 = vpop.f32.mrb[0].mxu0
    %765 = vmatprep.mubr.f32.mxu0 0.0
    %766 = vmatmul.mubr.f32.gmra.mrb[0].mxu0 %v624
    %v767 = vpop.f32.mrb[0].mxu0
    %v768 = vadd.f32 0.0, %v767
    %v769 = vpop.f32.mrb[0].mxu0
    %770 = vdwg.mxu0
    %v771 = vadd.f32 %v693, %v698
    %v772 = vadd.f32 %v771, %v703
    %v773 = vadd.f32 %v772, %v708
    %v774 = vadd.f32 %v773, %v713
    %v775 = vadd.f32 %v774, %v718
    %v776 = vadd.f32 %v775, %v723
    %v777 = vadd.f32 %v776, %v728
    %v778 = vadd.f32 %v777, %v733
    %v779 = vadd.f32 %v778, %v738
    %v780 = vadd.f32 %v779, %v743
    %v781 = vadd.f32 %v780, %v748
    %v782 = vadd.f32 %v781, %v753
    %v783 = vadd.f32 %v782, %v758
    %v784 = vadd.f32 %v783, %v763
    %v785 = vadd.f32 %v784, %v768
    %v786 = vrot.slane %v785, 4
    %v787 = vadd.f32 %v785, %v786
    %v788 = vrot.slane %v787, 2
    %v789 = vadd.f32 %v787, %v788
    %v790 = vrot.slane %v789, 1
    %v791 = vadd.f32 %v789, %v790
    %v792 = vadd.f32 %v522, %v791
    %v793 = vmul.f32 %v693, %v693
    %v794 = vmul.f32 %v698, %v698
    %v795 = vmul.f32 %v703, %v703
    %v796 = vmul.f32 %v708, %v708
    %v797 = vmul.f32 %v713, %v713
    %v798 = vmul.f32 %v718, %v718
    %v799 = vmul.f32 %v723, %v723
    %v800 = vmul.f32 %v728, %v728
    %v801 = vmul.f32 %v733, %v733
    %v802 = vmul.f32 %v738, %v738
    %v803 = vmul.f32 %v743, %v743
    %v804 = vmul.f32 %v748, %v748
    %v805 = vmul.f32 %v753, %v753
    %v806 = vmul.f32 %v758, %v758
    %v807 = vmul.f32 %v763, %v763
    %v808 = vmul.f32 %v768, %v768
    %v809 = vadd.f32 %v793, %v794
    %v810 = vadd.f32 %v809, %v795
    %v811 = vadd.f32 %v810, %v796
    %v812 = vadd.f32 %v811, %v797
    %v813 = vadd.f32 %v812, %v798
    %v814 = vadd.f32 %v813, %v799
    %v815 = vadd.f32 %v814, %v800
    %v816 = vadd.f32 %v815, %v801
    %v817 = vadd.f32 %v816, %v802
    %v818 = vadd.f32 %v817, %v803
    %v819 = vadd.f32 %v818, %v804
    %v820 = vadd.f32 %v819, %v805
    %v821 = vadd.f32 %v820, %v806
    %v822 = vadd.f32 %v821, %v807
    %v823 = vadd.f32 %v822, %v808
    %v824 = vrot.slane %v823, 4
    %v825 = vadd.f32 %v823, %v824
    %v826 = vrot.slane %v825, 2
    %v827 = vadd.f32 %v825, %v826
    %v828 = vrot.slane %v827, 1
    %v829 = vadd.f32 %v827, %v828
    %v830 = vadd.f32 %v560, %v829
    %s831 = scalar_lea.vmem %s0, 384
    %v832 = vld [vmem:[%s831] sm:$0xff]
    %v833 = vld [vmem:[%s831 + $0x8] sm:$0xff]
    %v834 = vld [vmem:[%s831 + $0x10] sm:$0xff]
    %v835 = vld [vmem:[%s831 + $0x18] sm:$0xff]
    %v836 = vld [vmem:[%s831 + $0x20] sm:$0xff]
    %v837 = vld [vmem:[%s831 + $0x28] sm:$0xff]
    %v838 = vld [vmem:[%s831 + $0x30] sm:$0xff]
    %v839 = vld [vmem:[%s831 + $0x38] sm:$0xff]
    %v840 = vld [vmem:[%s831 + $0x40] sm:$0xff]
    %v841 = vld [vmem:[%s831 + $0x48] sm:$0xff]
    %v842 = vld [vmem:[%s831 + $0x50] sm:$0xff]
    %v843 = vld [vmem:[%s831 + $0x58] sm:$0xff]
    %v844 = vld [vmem:[%s831 + $0x60] sm:$0xff]
    %v845 = vld [vmem:[%s831 + $0x68] sm:$0xff]
    %v846 = vld [vmem:[%s831 + $0x70] sm:$0xff]
    %v847 = vld [vmem:[%s831 + $0x78] sm:$0xff]
    %v849 = vsel %vm33, %v832, 0
    %v852 = vsel %vm33, %v833, 0
    %v855 = vsel %vm33, %v834, 0
    %v858 = vsel %vm33, %v835, 0
    %v861 = vsel %vm33, %v836, 0
    %v864 = vsel %vm33, %v837, 0
    %v867 = vsel %vm33, %v838, 0
    %v870 = vsel %vm33, %v839, 0
    %v873 = vsel %vm33, %v840, 0
    %v876 = vsel %vm33, %v841, 0
    %v879 = vsel %vm33, %v842, 0
    %v882 = vsel %vm33, %v843, 0
    %v885 = vsel %vm33, %v844, 0
    %v888 = vsel %vm33, %v845, 0
    %v891 = vsel %vm33, %v846, 0
    %v894 = vsel %vm33, %v847, 0
    %896 = vmatprep.subr.mxu0 0.0
    %897 = vmatpush1.msra.mxu0 %v28
    %898 = vmatprep.subr.mxu0 0.0
    %899 = vmatpush1.msra.mxu0 %v29
    %900 = vmatprep.subr.mxu0 0.0
    %901 = vmatpush1.msra.mxu0 %v30
    %902 = vmatprep.subr.mxu0 0.0
    %903 = vmatpush1.msra.mxu0 %v31
    %904 = vmatprep.subr.mxu0 0.0
    %905 = vmatpush1.msra.mxu0 %v84
    %906 = vmatprep.subr.mxu0 0.0
    %907 = vmatpush1.msra.mxu0 0.0
    %908 = vmatprep.subr.mxu0 0.0
    %909 = vmatpush1.msra.mxu0 0.0
    %910 = vmatprep.subr.mxu0 0.0
    %911 = vmatpush1.msra.mxu0 0.0
    %912 = vmatprep.subr.mxu0 0.0
    %913 = vmatpush1.msra.mxu0 0.0
    %914 = vmatprep.subr.mxu0 0.0
    %915 = vmatpush1.msra.mxu0 0.0
    %916 = vmatprep.subr.mxu0 0.0
    %917 = vmatpush1.msra.mxu0 0.0
    %918 = vmatprep.subr.mxu0 0.0
    %919 = vmatpush1.msra.mxu0 0.0
    %920 = vmatprep.subr.mxu0 0.0
    %921 = vmatpush1.msra.mxu0 0.0
    %922 = vmatprep.subr.mxu0 0.0
    %923 = vmatpush1.msra.mxu0 0.0
    %924 = vmatprep.subr.mxu0 0.0
    %925 = vmatpush1.msra.mxu0 0.0
    %926 = vmatprep.subr.mxu0 0.0
    %927 = vmatpush1.msra.mxu0 0.0
    %928 = vmatprep.subr.mxu0 0.0
    %929 = vmatpush1.msra.mxu0 0.0
    %930 = vmatprep.subr.mxu0 0.0
    %931 = vmatpush1.msra.mxu0 0.0
    %932 = vmatprep.subr.mxu0 0.0
    %933 = vmatpush1.msra.mxu0 0.0
    %934 = vmatprep.subr.mxu0 0.0
    %935 = vmatpush1.msra.mxu0 0.0
    %936 = vmatprep.subr.mxu0 0.0
    %937 = vmatpush1.msra.mxu0 0.0
    %938 = vmatprep.subr.mxu0 0.0
    %939 = vmatpush1.msra.mxu0 0.0
    %940 = vmatprep.subr.mxu0 0.0
    %941 = vmatpush1.msra.mxu0 0.0
    %942 = vmatprep.subr.mxu0 0.0
    %943 = vmatpush1.msra.mxu0 0.0
    %944 = vmatprep.subr.mxu0 0.0
    %945 = vmatpush1.msra.mxu0 0.0
    %946 = vmatprep.subr.mxu0 0.0
    %947 = vmatpush1.msra.mxu0 0.0
    %948 = vmatprep.subr.mxu0 0.0
    %949 = vmatpush1.msra.mxu0 0.0
    %950 = vmatprep.subr.mxu0 0.0
    %951 = vmatpush1.msra.mxu0 0.0
    %952 = vmatprep.subr.mxu0 0.0
    %953 = vmatpush1.msra.mxu0 0.0
    %954 = vmatprep.subr.mxu0 0.0
    %955 = vmatpush1.msra.mxu0 0.0
    %956 = vmatprep.subr.mxu0 0.0
    %957 = vmatpush1.msra.mxu0 0.0
    %958 = vmatprep.subr.mxu0 0.0
    %959 = vmatpush1.msra.mxu0 0.0
    %960 = vmatprep.mubr.f32.mxu0 0.0
    %961 = vmatmul.mubr.f32.gmra.mrb[0].mxu0 %v849
    %v962 = vpop.f32.mrb[0].mxu0
    %v963 = vadd.f32 0.0, %v962
    %v964 = vpop.f32.mrb[0].mxu0
    %965 = vmatprep.mubr.f32.mxu0 0.0
    %966 = vmatmul.mubr.f32.gmra.mrb[0].mxu0 %v852
    %v967 = vpop.f32.mrb[0].mxu0
    %v968 = vadd.f32 0.0, %v967
    %v969 = vpop.f32.mrb[0].mxu0
    %970 = vmatprep.mubr.f32.mxu0 0.0
    %971 = vmatmul.mubr.f32.gmra.mrb[0].mxu0 %v855
    %v972 = vpop.f32.mrb[0].mxu0
    %v973 = vadd.f32 0.0, %v972
    %v974 = vpop.f32.mrb[0].mxu0
    %975 = vmatprep.mubr.f32.mxu0 0.0
    %976 = vmatmul.mubr.f32.gmra.mrb[0].mxu0 %v858
    %v977 = vpop.f32.mrb[0].mxu0
    %v978 = vadd.f32 0.0, %v977
    %v979 = vpop.f32.mrb[0].mxu0
    %980 = vmatprep.mubr.f32.mxu0 0.0
    %981 = vmatmul.mubr.f32.gmra.mrb[0].mxu0 %v861
    %v982 = vpop.f32.mrb[0].mxu0
    %v983 = vadd.f32 0.0, %v982
    %v984 = vpop.f32.mrb[0].mxu0
    %985 = vmatprep.mubr.f32.mxu0 0.0
    %986 = vmatmul.mubr.f32.gmra.mrb[0].mxu0 %v864
    %v987 = vpop.f32.mrb[0].mxu0
    %v988 = vadd.f32 0.0, %v987
    %v989 = vpop.f32.mrb[0].mxu0
    %990 = vmatprep.mubr.f32.mxu0 0.0
    %991 = vmatmul.mubr.f32.gmra.mrb[0].mxu0 %v867
    %v992 = vpop.f32.mrb[0].mxu0
    %v993 = vadd.f32 0.0, %v992
    %v994 = vpop.f32.mrb[0].mxu0
    %995 = vmatprep.mubr.f32.mxu0 0.0
    %996 = vmatmul.mubr.f32.gmra.mrb[0].mxu0 %v870
    %v997 = vpop.f32.mrb[0].mxu0
    %v998 = vadd.f32 0.0, %v997
    %v999 = vpop.f32.mrb[0].mxu0
    %1000 = vmatprep.mubr.f32.mxu0 0.0
    %1001 = vmatmul.mubr.f32.gmra.mrb[0].mxu0 %v873
    %v1002 = vpop.f32.mrb[0].mxu0
    %v1003 = vadd.f32 0.0, %v1002
    %v1004 = vpop.f32.mrb[0].mxu0
    %1005 = vmatprep.mubr.f32.mxu0 0.0
    %1006 = vmatmul.mubr.f32.gmra.mrb[0].mxu0 %v876
    %v1007 = vpop.f32.mrb[0].mxu0
    %v1008 = vadd.f32 0.0, %v1007
    %v1009 = vpop.f32.mrb[0].mxu0
    %1010 = vmatprep.mubr.f32.mxu0 0.0
    %1011 = vmatmul.mubr.f32.gmra.mrb[0].mxu0 %v879
    %v1012 = vpop.f32.mrb[0].mxu0
    %v1013 = vadd.f32 0.0, %v1012
    %v1014 = vpop.f32.mrb[0].mxu0
    %1015 = vmatprep.mubr.f32.mxu0 0.0
    %1016 = vmatmul.mubr.f32.gmra.mrb[0].mxu0 %v882
    %v1017 = vpop.f32.mrb[0].mxu0
    %v1018 = vadd.f32 0.0, %v1017
    %v1019 = vpop.f32.mrb[0].mxu0
    %1020 = vmatprep.mubr.f32.mxu0 0.0
    %1021 = vmatmul.mubr.f32.gmra.mrb[0].mxu0 %v885
    %v1022 = vpop.f32.mrb[0].mxu0
    %v1023 = vadd.f32 0.0, %v1022
    %v1024 = vpop.f32.mrb[0].mxu0
    %1025 = vmatprep.mubr.f32.mxu0 0.0
    %1026 = vmatmul.mubr.f32.gmra.mrb[0].mxu0 %v888
    %v1027 = vpop.f32.mrb[0].mxu0
    %v1028 = vadd.f32 0.0, %v1027
    %v1029 = vpop.f32.mrb[0].mxu0
    %1030 = vmatprep.mubr.f32.mxu0 0.0
    %1031 = vmatmul.mubr.f32.gmra.mrb[0].mxu0 %v891
    %v1032 = vpop.f32.mrb[0].mxu0
    %v1033 = vadd.f32 0.0, %v1032
    %v1034 = vpop.f32.mrb[0].mxu0
    %1035 = vmatprep.mubr.f32.mxu0 0.0
    %1036 = vmatmul.mubr.f32.gmra.mrb[0].mxu0 %v894
    %v1037 = vpop.f32.mrb[0].mxu0
    %v1038 = vadd.f32 0.0, %v1037
    %v1039 = vpop.f32.mrb[0].mxu0
    %1040 = vdwg.mxu0
    %v1041 = vadd.f32 %v963, %v968
    %v1042 = vadd.f32 %v1041, %v973
    %v1043 = vadd.f32 %v1042, %v978
    %v1044 = vadd.f32 %v1043, %v983
    %v1045 = vadd.f32 %v1044, %v988
    %v1046 = vadd.f32 %v1045, %v993
    %v1047 = vadd.f32 %v1046, %v998
    %v1048 = vadd.f32 %v1047, %v1003
    %v1049 = vadd.f32 %v1048, %v1008
    %v1050 = vadd.f32 %v1049, %v1013
    %v1051 = vadd.f32 %v1050, %v1018
    %v1052 = vadd.f32 %v1051, %v1023
    %v1053 = vadd.f32 %v1052, %v1028
    %v1054 = vadd.f32 %v1053, %v1033
    %v1055 = vadd.f32 %v1054, %v1038
    %v1056 = vrot.slane %v1055, 4
    %v1057 = vadd.f32 %v1055, %v1056
    %v1058 = vrot.slane %v1057, 2
    %v1059 = vadd.f32 %v1057, %v1058
    %v1060 = vrot.slane %v1059, 1
    %v1061 = vadd.f32 %v1059, %v1060
    %v1062 = vadd.f32 %v792, %v1061
    %v1063 = vmul.f32 %v963, %v963
    %v1064 = vmul.f32 %v968, %v968
    %v1065 = vmul.f32 %v973, %v973
    %v1066 = vmul.f32 %v978, %v978
    %v1067 = vmul.f32 %v983, %v983
    %v1068 = vmul.f32 %v988, %v988
    %v1069 = vmul.f32 %v993, %v993
    %v1070 = vmul.f32 %v998, %v998
    %v1071 = vmul.f32 %v1003, %v1003
    %v1072 = vmul.f32 %v1008, %v1008
    %v1073 = vmul.f32 %v1013, %v1013
    %v1074 = vmul.f32 %v1018, %v1018
    %v1075 = vmul.f32 %v1023, %v1023
    %v1076 = vmul.f32 %v1028, %v1028
    %v1077 = vmul.f32 %v1033, %v1033
    %v1078 = vmul.f32 %v1038, %v1038
    %v1079 = vadd.f32 %v1063, %v1064
    %v1080 = vadd.f32 %v1079, %v1065
    %v1081 = vadd.f32 %v1080, %v1066
    %v1082 = vadd.f32 %v1081, %v1067
    %v1083 = vadd.f32 %v1082, %v1068
    %v1084 = vadd.f32 %v1083, %v1069
    %v1085 = vadd.f32 %v1084, %v1070
    %v1086 = vadd.f32 %v1085, %v1071
    %v1087 = vadd.f32 %v1086, %v1072
    %v1088 = vadd.f32 %v1087, %v1073
    %v1089 = vadd.f32 %v1088, %v1074
    %v1090 = vadd.f32 %v1089, %v1075
    %v1091 = vadd.f32 %v1090, %v1076
    %v1092 = vadd.f32 %v1091, %v1077
    %v1093 = vadd.f32 %v1092, %v1078
    %v1094 = vrot.slane %v1093, 4
    %v1095 = vadd.f32 %v1093, %v1094
    %v1096 = vrot.slane %v1095, 2
    %v1097 = vadd.f32 %v1095, %v1096
    %v1098 = vrot.slane %v1097, 1
    %v1099 = vadd.f32 %v1097, %v1098
    %v1100 = vadd.f32 %v830, %v1099
    %vm1101 = vcmask 1040384
    %v1102 = vsel %vm1101, %v1062, %v1100
    %1103 = vst [vmem:[#allocation2] sm:$0x3] %v1102
    // Predicated region
    $region10: #{tpu_custom_call.1} parent=1 // pred_check
      _
    $region11: #{tpu_custom_call.1} parent=1 // pred_check_branch
      %1105 = sbr.rel (0) target = $region13
    $region12: #{tpu_custom_call.1} parent=1 // pred_region
      %s1107 = ssub.s32 32, 32
      %1108 = vsyncadd [#allocation3], %s1107
      %s1110 = sshll.u32 [#allocation2], 4
      %s1111 = int_to_ptr.vmem [resolvable:$true] %s1110
      %1113 = dma.vmem_to_hbm [thread:$0]  %s1111, 32, %s2, [#allocation3]
    $region13: #{tpu_custom_call.1} parent=1 // pred_fallthru
      _
    // Predicated region
    $region14: #{tpu_custom_call.1} parent=1 // pred_check
      _
    $region15: #{tpu_custom_call.1} parent=1 // pred_check_branch
      %1115 = sbr.rel (0) target = $region17
    $region16: #{tpu_custom_call.1} parent=1 // pred_region
      %1116 = dma.done [#allocation3], 32
    $region17: #{tpu_custom_call.1} parent=1 // pred_fallthru
      _
    %1117 = vsyncpa [#allocation3], 1

</llo_original>
